<compile_context>
chip_gen: v6e
topology: v6e:2x2x1
jax: 0.10.0
libtpu: 0.0.40
codegen_flags: <defaults>
</compile_context>

<pallas_src>
import jax
import jax.numpy as jnp
from jax import lax
from jax.experimental import pallas as pl
from jax.experimental.pallas import tpu as pltpu

# Per-block byte budget for the x tile.  in + out double buffers => 4x this,
# which stays comfortably inside the default scoped-VMEM limit and v7x VMEM.
_MAX_BLOCK_BYTES = 4 * 1024 * 1024


def _se_kernel(x_ref, w1_ref, w2_ref, out_ref):
    # x_ref block: (B, C, HW) f32 in VMEM  (HW on the lane axis -> lane-dense)
    # w1_ref: (C, Cr), w2_ref: (Cr, C) f32 in VMEM (Linear weights as matmul mats)

    # ---- Squeeze: global average pool over the spatial (lane) axis ----
    pooled = jnp.mean(x_ref[...], axis=-1)                    # (B, C)

    # ---- Excite: fused tiny MLP (one matmul pair for the whole block) ----
    hp = lax.Precision.HIGHEST
    h = jnp.maximum(
        jnp.dot(pooled, w1_ref[...],
                preferred_element_type=jnp.float32, precision=hp), 0.0)   # (B, Cr)
    y = jax.nn.sigmoid(
        jnp.dot(h, w2_ref[...],
                preferred_element_type=jnp.float32, precision=hp))        # (B, C)

    # ---- Scale: per-channel gate, broadcast along the lane (H*W) axis ----
    # Re-read x_ref here (cheap VMEM load) so the tile need not stay live in
    # vregs across the MLP above.
    out_ref[...] = (x_ref[...] * y[:, :, None]).astype(out_ref.dtype)


def se_layer_pallas(x_nchw, w1, w2):
    """SELayer forward.

    x_nchw: (N, C, H, W) f32
    w1:     (C, C//r)  == fc1.weight.T of nn.Linear(C, C//r, bias=False)
    w2:     (C//r, C)  == fc2.weight.T of nn.Linear(C//r, C, bias=False)
    returns (N, C, H, W) f32
    """
    N, C, H, W = x_nchw.shape
    Cr = w1.shape[1]
    HW = H * W

    x = x_nchw.reshape(N, C, HW).astype(jnp.float32)   # free reshape, stays NCHW
    w1 = w1.astype(jnp.float32)
    w2 = w2.astype(jnp.float32)

    # Images per block: keep >=2 parallel grid steps when N>=2 (v7x megacore),
    # fold the rest into a block (amortize per-step overhead on v5e/v6e), and
    # cap block bytes for the VMEM budget.  block_batch must divide N.
    bytes_per_image = C * HW * 4
    block_batch = max(1, N // 2)
    block_batch = max(1, min(block_batch, _MAX_BLOCK_BYTES // max(bytes_per_image, 1)))
    while N % block_batch:
        block_batch -= 1
    grid = (N // block_batch,)
    # TODO(synk): for very large feature maps (single image > _MAX_BLOCK_BYTES),
    # tile over H*W with a two-pass pool (pool pass, then scale pass) instead of
    # whole-image blocks.

    out = pl.pallas_call(
        _se_kernel,
        out_shape=jax.ShapeDtypeStruct((N, C, HW), jnp.float32),
        grid=grid,
        in_specs=[
            pl.BlockSpec((block_batch, C, HW), lambda n: (n, 0, 0)),
            pl.BlockSpec((C, Cr), lambda n: (0, 0)),   # constant index -> stays resident
            pl.BlockSpec((Cr, C), lambda n: (0, 0)),
        ],
        out_specs=pl.BlockSpec((block_batch, C, HW), lambda n: (n, 0, 0)),
        compiler_params=pltpu.CompilerParams(
            dimension_semantics=("parallel",)),
    )(x, w1, w2)
    return out.reshape(N, C, H, W)


def se_layer_ref(x, w1, w2):
    """Pure-JAX reference matching the PyTorch SELayer.forward (NCHW)."""
    hp = lax.Precision.HIGHEST
    y = jnp.mean(x, axis=(2, 3))                                  # (N, C)
    y = jnp.maximum(jnp.dot(y, w1, precision=hp), 0.0)            # (N, Cr)
    y = jax.nn.sigmoid(jnp.dot(y, w2, precision=hp))              # (N, C)
    return x * y[:, :, None, None]


if __name__ == "__main__":
    # SELayer(channel=64, reduction=16): hidden width Cr = 4.
    N, C, H, W = 2, 64, 16, 16
    reduction = 16
    Cr = C // reduction

    key = jax.random.PRNGKey(0)
    kx, k1, k2 = jax.random.split(key, 3)
    x = jax.random.normal(kx, (N, C, H, W), jnp.float32)
    # Synthetic Linear weights (bias=False), stored as matmul matrices
    # (i.e. already transposed relative to nn.Linear.weight).
    w1 = jax.random.normal(k1, (C, Cr), jnp.float32) * (1.0 / jnp.sqrt(C))
    w2 = jax.random.normal(k2, (Cr, C), jnp.float32) * (1.0 / jnp.sqrt(Cr))

    out = jax.block_until_ready(se_layer_pallas(x, w1, w2))
    ref = jax.block_until_ready(se_layer_ref(x, w1, w2))

    assert out.shape == (N, C, H, W)
    max_err = float(jnp.max(jnp.abs(out - ref)))
    if max_err > 1e-4:
        raise AssertionError(f"kernel/reference mismatch: max abs err = {max_err}")
    print("KERNEL_OK")
</pallas_src>

<mosaic_0001>
module attributes {stable_mosaic.version = 11 : i64} {
  func.func @_se_kernel(%arg0: i32, %arg1: memref<1x64x256xf32, #tpu.memory_space<vmem>>, %arg2: memref<64x4xf32, #tpu.memory_space<vmem>>, %arg3: memref<4x64xf32, #tpu.memory_space<vmem>>, %arg4: memref<1x64x256xf32, #tpu.memory_space<vmem>>) attributes {dimension_semantics = [#tpu.dimension_semantics<parallel>], iteration_bounds = array<i64: 2>, scalar_prefetch = 0 : i64, scratch_operands = 0 : i64, tpu.core_type = #tpu.core_type<tc>, window_params = [{transform_indices = @transform_0, window_bounds = array<i64: 1, 64, 256>}, {pipeline_mode = #tpu.pipeline_mode<synchronous>, transform_indices = @transform_1, window_bounds = array<i64: 64, 4>}, {pipeline_mode = #tpu.pipeline_mode<synchronous>, transform_indices = @transform_2, window_bounds = array<i64: 4, 64>}, {transform_indices = @transform_3, window_bounds = array<i64: 1, 64, 256>}]} {
    %c0 = arith.constant 0 : index
    %c0_0 = arith.constant 0 : index
    %c0_1 = arith.constant 0 : index
    %0 = vector.load %arg1[%c0, %c0_0, %c0_1] : memref<1x64x256xf32, #tpu.memory_space<vmem>>, vector<1x64x256xf32>
    %cst = arith.constant dense<0.000000e+00> : vector<1x64xf32>
    %1 = vector.multi_reduction <add>, %0, %cst [2] : vector<1x64x256xf32> to vector<1x64xf32>
    %cst_2 = arith.constant 2.560000e+02 : f32
    %2 = vector.broadcast %cst_2 : f32 to vector<1x64xf32>
    %3 = arith.divf %1, %2 : vector<1x64xf32>
    %c0_3 = arith.constant 0 : index
    %c0_4 = arith.constant 0 : index
    %4 = vector.load %arg2[%c0_3, %c0_4] : memref<64x4xf32, #tpu.memory_space<vmem>>, vector<64x4xf32>
    %cst_5 = arith.constant dense<0.000000e+00> : vector<1x4xf32>
    %5 = tpu.matmul %3, %4, %cst_5 {dimension_numbers = #tpu.dot_dimension_numbers<[1], [0], [0], [1], [0, 0, 1, 1], [], []>, precision = #tpu.contract_precision<fp32>} : vector<1x64xf32>, vector<64x4xf32>, vector<1x4xf32> -> vector<1x4xf32>
    %cst_6 = arith.constant 0.000000e+00 : f32
    %6 = vector.broadcast %cst_6 : f32 to vector<1x4xf32>
    %7 = arith.maximumf %5, %6 : vector<1x4xf32>
    %c0_7 = arith.constant 0 : index
    %c0_8 = arith.constant 0 : index
    %8 = vector.load %arg3[%c0_7, %c0_8] : memref<4x64xf32, #tpu.memory_space<vmem>>, vector<4x64xf32>
    %cst_9 = arith.constant dense<0.000000e+00> : vector<1x64xf32>
    %9 = tpu.matmul %7, %8, %cst_9 {dimension_numbers = #tpu.dot_dimension_numbers<[1], [0], [0], [1], [0, 0, 1, 1], [], []>, precision = #tpu.contract_precision<fp32>} : vector<1x4xf32>, vector<4x64xf32>, vector<1x64xf32> -> vector<1x64xf32>
    %10 = arith.negf %9 : vector<1x64xf32>
    %11 = math.exp %10 : vector<1x64xf32>
    %cst_10 = arith.constant 1.000000e+00 : f32
    %12 = vector.broadcast %cst_10 : f32 to vector<1x64xf32>
    %13 = arith.addf %12, %11 : vector<1x64xf32>
    %14 = arith.divf %12, %13 : vector<1x64xf32>
    %c0_11 = arith.constant 0 : index
    %c0_12 = arith.constant 0 : index
    %c0_13 = arith.constant 0 : index
    %15 = vector.load %arg1[%c0_11, %c0_12, %c0_13] : memref<1x64x256xf32, #tpu.memory_space<vmem>>, vector<1x64x256xf32>
    %16 = vector.shape_cast %14 : vector<1x64xf32> to vector<1x64x1xf32>
    %17 = vector.broadcast %16 : vector<1x64x1xf32> to vector<1x64x256xf32>
    %18 = arith.mulf %15, %17 : vector<1x64x256xf32>
    %c0_14 = arith.constant 0 : index
    %c0_15 = arith.constant 0 : index
    %c0_16 = arith.constant 0 : index
    %19 = vector.load %arg4[%c0_14, %c0_15, %c0_16] : memref<1x64x256xf32, #tpu.memory_space<vmem>>, vector<1x64x256xf32>
    tpu.vector_store %arg4[%c0_14, %c0_15, %c0_16], %18 {strides = array<i32>} : memref<1x64x256xf32, #tpu.memory_space<vmem>>, vector<1x64x256xf32>,
    return
  }
  func.func @transform_0(%arg0: i32) -> (i32, i32, i32) {
    %c0_i32 = arith.constant 0 : i32
    %c0_i32_0 = arith.constant 0 : i32
    %c0_i32_1 = arith.constant 0 : i32
    return %arg0, %c0_i32, %c0_i32_0 : i32, i32, i32
  }
  func.func @transform_1(%arg0: i32) -> (i32, i32) {
    %c0_i32 = arith.constant 0 : i32
    %c0_i32_0 = arith.constant 0 : i32
    %c0_i32_1 = arith.constant 0 : i32
    return %c0_i32, %c0_i32_0 : i32, i32
  }
  func.func @transform_2(%arg0: i32) -> (i32, i32) {
    %c0_i32 = arith.constant 0 : i32
    %c0_i32_0 = arith.constant 0 : i32
    %c0_i32_1 = arith.constant 0 : i32
    return %c0_i32, %c0_i32_0 : i32, i32
  }
  func.func @transform_3(%arg0: i32) -> (i32, i32, i32) {
    %c0_i32 = arith.constant 0 : i32
    %c0_i32_0 = arith.constant 0 : i32
    %c0_i32_1 = arith.constant 0 : i32
    return %arg0, %c0_i32, %c0_i32_0 : i32, i32, i32
  }
}

</mosaic_0001>

<llo_original>
// kernel: tpu_custom_call.1
$region0: #{tpu_custom_call.1}
  #allocation0 [shape = 'u32[]', space=smem, size = 0x4, offset = 0x4, fixed_abs, tag = 'smem constant byte address 0x4 - core index']
  #allocation1 [shape = 'u32[144,128]{1,0:T(1,128)}', space=vmem, size = 0x12000, scoped, tag = 'internal scratch']
  %s0 = inlined_call_operand.hbm [shape: f32[2,64,256], index: 0, kind: input, shape index: {}]
  %s1 = inlined_call_operand.vmem [shape: f32[64,4], index: 1, kind: input, shape index: {}]
  %s2 = inlined_call_operand.vmem [shape: f32[4,64], index: 2, kind: input, shape index: {}]
  %s3 = inlined_call_operand.hbm [shape: f32[2,64,256], index: 3, kind: output, shape index: {}]
  %s4 = sld [smem:[#allocation0]]
  $region49: #{tpu_custom_call.1} parent=0
    _
  %s6 = ssub.s32 1, %s4
  %s7 = scalar_select 0, %s6, %s4
  $region1: #{tpu_custom_call.1} parent=0
    #allocation2 [shape = 'u8[131072]{0}', space=vmem, size = 0x20000, scoped, tag = 'input window, operand 0']
    #allocation3 [shape = 's32[2]{0}', space=sflag, size = 0x8, scoped, tag = 'scoped memory for tpu_custom_call.1']
    #allocation4 [shape = 's32[2]{0}', space=sflag, size = 0x8, scoped, tag = 'scoped memory for tpu_custom_call.1']
    #allocation5 [shape = 'u8[131072]{0}', space=vmem, size = 0x20000, scoped, tag = 'output window, operand 0']
    %8 = vsyncpa [#allocation3], 0
    %s9 = scalar_lea.sflag [#allocation3], 1
    %10 = vsyncpa %s9, 0
    %11 = vsyncpa [#allocation4], 0
    %s12 = scalar_lea.sflag [#allocation4], 1
    %13 = vsyncpa %s12, 0
    loop: start=0, step=1, limit=4
    $region2: #{tpu_custom_call.1} parent=1 // loop_pre_header
      _
    $region3: #{tpu_custom_call.1} parent=1 // loop_header
      %s15 = sphi 0, %s19
      %p16 = scmp.ge.s32.totalorder %s15, 4
      %s25 = sphi 0, %s27
      %s28 = sphi 0, %s25
      %s29 = sphi 0, %s28
      %s45 = sphi 0, %s29
      %s49 = sphi 0, %s49
      %s51 = sphi 0, %s49
      %s52 = sphi 0, %s51
      %s66 = sphi 0, %s52
      %s70 = sphi 0, %s70
      %s72 = sphi 0, %s70
      %s73 = sphi 0, %s72
      %s87 = sphi 0, %s73
      %s93 = sphi 0, %s95
      %s96 = sphi 0, %s93
      %s97 = sphi 0, %s96
      %s113 = sphi 0, %s97
    $region4: #{tpu_custom_call.1} parent=1 // loop_header_branch
      %18 = sbr.rel (%p16) target = $region8
    $region5: #{tpu_custom_call.1} parent=1 // loop_body
      %s20 = ssub.s32 %s15, 1
      %s21 = ssub.s32 %s15, 2
      %s22 = sadd.s32 %s15, 1
      %s23 = ssub.s32 %s15, %s22
      %p24 = scmp.eq.s32.totalorder %s23, 0
      %s26 = sadd.s32 %s25, 1
      %s27 = scalar_select %p24, %s25, %s26
      %p30 = pneg %p24
      %p31 = scmp.eq.s32.totalorder %s15, 1
      %p32 = por %p30, %p31
      %p33 = scmp.ne.s32.totalorder %s25, %s28
      %p34 = scmp.eq.s32.totalorder %s15, 0
      %p35 = por %p33, %p34
      %p36 = scmp.ne.s32.totalorder %s25, %s28
      %p37 = scmp.eq.s32.totalorder %s20, 1
      %p38 = por %p36, %p37
      %p39 = scmp.ne.s32.totalorder %s28, %s29
      %p40 = scmp.eq.s32.totalorder %s20, 0
      %p41 = por %p39, %p40
      %p42 = scmp.ne.s32.totalorder %s28, %s29
      %p43 = scmp.eq.s32.totalorder %s21, 1
      %p44 = por %p42, %p43
      %p46 = scmp.ne.s32.totalorder %s29, %s45
      %p47 = scmp.eq.s32.totalorder %s21, 0
      %p48 = por %p46, %p47
      %s50 = sadd.s32 %s49, 1
      %p53 = scmp.eq.s32.totalorder %s15, 1
      %p54 = scmp.ne.s32.totalorder %s49, %s51
      %p55 = scmp.eq.s32.totalorder %s15, 0
      %p56 = por %p54, %p55
      %p57 = scmp.ne.s32.totalorder %s49, %s51
      %p58 = scmp.eq.s32.totalorder %s20, 1
      %p59 = por %p57, %p58
      %p60 = scmp.ne.s32.totalorder %s51, %s52
      %p61 = scmp.eq.s32.totalorder %s20, 0
      %p62 = por %p60, %p61
      %p63 = scmp.ne.s32.totalorder %s51, %s52
      %p64 = scmp.eq.s32.totalorder %s21, 1
      %p65 = por %p63, %p64
      %p67 = scmp.ne.s32.totalorder %s52, %s66
      %p68 = scmp.eq.s32.totalorder %s21, 0
      %p69 = por %p67, %p68
      %s71 = sadd.s32 %s70, 1
      %p74 = scmp.eq.s32.totalorder %s15, 1
      %p75 = scmp.ne.s32.totalorder %s70, %s72
      %p76 = scmp.eq.s32.totalorder %s15, 0
      %p77 = por %p75, %p76
      %p78 = scmp.ne.s32.totalorder %s70, %s72
      %p79 = scmp.eq.s32.totalorder %s20, 1
      %p80 = por %p78, %p79
      %p81 = scmp.ne.s32.totalorder %s72, %s73
      %p82 = scmp.eq.s32.totalorder %s20, 0
      %p83 = por %p81, %p82
      %p84 = scmp.ne.s32.totalorder %s72, %s73
      %p85 = scmp.eq.s32.totalorder %s21, 1
      %p86 = por %p84, %p85
      %p88 = scmp.ne.s32.totalorder %s73, %s87
      %p89 = scmp.eq.s32.totalorder %s21, 0
      %p90 = por %p88, %p89
      %s91 = ssub.s32 %s15, %s22
      %p92 = scmp.eq.s32.totalorder %s91, 0
      %s94 = sadd.s32 %s93, 1
      %s95 = scalar_select %p92, %s93, %s94
      %p98 = pneg %p92
      %p99 = scmp.eq.s32.totalorder %s15, 1
      %p100 = por %p98, %p99
      %p101 = scmp.ne.s32.totalorder %s93, %s96
      %p102 = scmp.eq.s32.totalorder %s15, 0
      %p103 = por %p101, %p102
      %p104 = scmp.ne.s32.totalorder %s93, %s96
      %p105 = scmp.eq.s32.totalorder %s20, 1
      %p106 = por %p104, %p105
      %p107 = scmp.ne.s32.totalorder %s96, %s97
      %p108 = scmp.eq.s32.totalorder %s20, 0
      %p109 = por %p107, %p108
      %p110 = scmp.ne.s32.totalorder %s96, %s97
      %p111 = scmp.eq.s32.totalorder %s21, 1
      %p112 = por %p110, %p111
      %p114 = scmp.ne.s32.totalorder %s97, %s113
      %p115 = scmp.eq.s32.totalorder %s21, 0
      %p116 = por %p114, %p115
      %p117 = scmp.le.s32.totalorder 1, %s15
      %p118 = scmp.lt.s32.totalorder %s15, 3
      %p119 = pnand %p117, %p118
      %p120 = pneg %p119
      // Predicated region
      $region9: #{tpu_custom_call.1} parent=5 // pred_check
        _
      $region10: #{tpu_custom_call.1} parent=5 // pred_check_branch
        %122 = sbr.rel (%p119) target = $region12
      $region11: #{tpu_custom_call.1} parent=5 // pred_region
        %s123 = ssub.s32 %s15, 1
        // Predicated region
        $region13: #{tpu_custom_call.1} parent=11 // pred_check
          %p124 = pneg %p62
        $region14: #{tpu_custom_call.1} parent=11 // pred_check_branch
          %126 = sbr.rel (%p124) target = $region16
        $region15: #{tpu_custom_call.1} parent=11 // pred_region
          _
        $region16: #{tpu_custom_call.1} parent=11 // pred_fallthru
          _
        // Predicated region
        $region17: #{tpu_custom_call.1} parent=11 // pred_check
          %p127 = pneg %p83
        $region18: #{tpu_custom_call.1} parent=11 // pred_check_branch
          %129 = sbr.rel (%p127) target = $region20
        $region19: #{tpu_custom_call.1} parent=11 // pred_region
          _
        $region20: #{tpu_custom_call.1} parent=11 // pred_fallthru
          _
      $region12: #{tpu_custom_call.1} parent=5 // pred_fallthru
        _
      %p130 = scmp.lt.s32.totalorder %s15, 2
      // Predicated region
      $region21: #{tpu_custom_call.1} parent=5 // pred_check
        %p131 = pneg %p130
      $region22: #{tpu_custom_call.1} parent=5 // pred_check_branch
        %133 = sbr.rel (%p131) target = $region24
      $region23: #{tpu_custom_call.1} parent=5 // pred_region
        // Predicated region
        $region25: #{tpu_custom_call.1} parent=23 // pred_check
          %p134 = pneg %p35
        $region26: #{tpu_custom_call.1} parent=23 // pred_check_branch
          %136 = sbr.rel (%p134) target = $region28
        $region27: #{tpu_custom_call.1} parent=23 // pred_region
          %s137 = sand.u32 %s25, 1
          %s138 = scalar_lea.sflag [#allocation3], %s137
          %s139 = sand.u32 %s25, 1
          %s140 = smul.addr %s139, 128
          %s141 = scalar_lea.vmem [#allocation2], %s140
          %s143 = ssub.s32 2048, 2048
          %144 = vsyncadd %s138, %s143
          %s145 = smul.addr %s15, 16
          %s146 = smul.addr %s145, 128
          %s147 = scalar_lea.hbm %s0, %s146
          %s148 = sshll.u32 %s141, 4
          %s149 = int_to_ptr.vmem [resolvable:$true] %s148
          %154 = dma.hbm_to_vmem [thread:$0]  %s147, 2048, %s149, %s138, 256, 256, 16
        $region28: #{tpu_custom_call.1} parent=23 // pred_fallthru
          _
      $region24: #{tpu_custom_call.1} parent=5 // pred_fallthru
        _
      %p155 = scmp.le.s32.totalorder 1, %s15
      %p156 = scmp.lt.s32.totalorder %s15, 3
      %p157 = pnand %p155, %p156
      %p158 = pneg %p157
      // Predicated region
      $region29: #{tpu_custom_call.1} parent=5 // pred_check
        _
      $region30: #{tpu_custom_call.1} parent=5 // pred_check_branch
        %160 = sbr.rel (%p157) target = $region32
      $region31: #{tpu_custom_call.1} parent=5 // pred_region
        %s161 = ssub.s32 %s15, 1
        %s162 = sand.u32 %s28, 1
        %s163 = scalar_lea.sflag [#allocation3], %s162
        %s164 = sand.u32 %s28, 1
        %s165 = smul.addr %s164, 128
        %s166 = scalar_lea.vmem [#allocation2], %s165
        // Predicated region
        $region33: #{tpu_custom_call.1} parent=31 // pred_check
          %p167 = pneg %p41
        $region34: #{tpu_custom_call.1} parent=31 // pred_check_branch
          %169 = sbr.rel (%p167) target = $region36
        $region35: #{tpu_custom_call.1} parent=31 // pred_region
          %170 = dma.done %s163, 2048
        $region36: #{tpu_custom_call.1} parent=31 // pred_fallthru
          _
        %s171 = sand.u32 %s28, 1
        %s172 = scalar_lea.sflag [#allocation3], %s171
        %s173 = sand.u32 %s28, 1
        %s174 = smul.addr %s173, 128
        %s175 = scalar_lea.vmem [#allocation2], %s174
        %p176 = pneg %p41
        %p177 = pneg %p38
        %p178 = pneg %p62
        %p179 = pneg %p59
        %p180 = pneg %p83
        %p181 = pneg %p80
        %p182 = pneg %p109
        %p183 = pneg %p106
        %s184 = sand.u32 %s96, 1
        %s185 = scalar_lea.sflag [#allocation4], %s184
        %s186 = sand.u32 %s96, 1
        %s187 = smul.addr %s186, 128
        %s188 = scalar_lea.vmem [#allocation5], %s187
        %v189 = vld [vmem:[%s166] sm:$0xff]
        %v190 = vld [vmem:[%s166 + $0x8] sm:$0xff]
        %v191 = vld [vmem:[%s166 + $0x10] sm:$0xff]
        %v192 = vld [vmem:[%s166 + $0x18] sm:$0xff]
        %v193 = vld [vmem:[%s166 + $0x20] sm:$0xff]
        %v194 = vld [vmem:[%s166 + $0x28] sm:$0xff]
        %v195 = vld [vmem:[%s166 + $0x30] sm:$0xff]
        %v196 = vld [vmem:[%s166 + $0x38] sm:$0xff]
        %v197 = vld [vmem:[%s166 + $0x40] sm:$0xff]
        %v198 = vld [vmem:[%s166 + $0x48] sm:$0xff]
        %v199 = vld [vmem:[%s166 + $0x50] sm:$0xff]
        %v200 = vld [vmem:[%s166 + $0x58] sm:$0xff]
        %v201 = vld [vmem:[%s166 + $0x60] sm:$0xff]
        %v202 = vld [vmem:[%s166 + $0x68] sm:$0xff]
        %v203 = vld [vmem:[%s166 + $0x70] sm:$0xff]
        %v204 = vld [vmem:[%s166 + $0x78] sm:$0xff]
        %v205 = vadd.f32 %v189, %v190
        %206 = vadd.xlane.f32.xlu0 %v205
        %v207 = vpop.xlane.xlu0 %206
        %v208 = vadd.f32 %v191, %v192
        %209 = vadd.xlane.f32.xlu0 %v208
        %v210 = vpop.xlane.xlu0 %209
        %v211 = vadd.f32 %v193, %v194
        %212 = vadd.xlane.f32.xlu0 %v211
        %v213 = vpop.xlane.xlu0 %212
        %v214 = vadd.f32 %v195, %v196
        %215 = vadd.xlane.f32.xlu0 %v214
        %v216 = vpop.xlane.xlu0 %215
        %v217 = vadd.f32 %v197, %v198
        %218 = vadd.xlane.f32.xlu0 %v217
        %v219 = vpop.xlane.xlu0 %218
        %v220 = vadd.f32 %v199, %v200
        %221 = vadd.xlane.f32.xlu0 %v220
        %v222 = vpop.xlane.xlu0 %221
        %v223 = vadd.f32 %v201, %v202
        %224 = vadd.xlane.f32.xlu0 %v223
        %v225 = vpop.xlane.xlu0 %224
        %v226 = vadd.f32 %v203, %v204
        %227 = vadd.xlane.f32.xlu0 %v226
        %v228 = vpop.xlane.xlu0 %227
        %v229 = vrcp.pop 256.0
        %v230 = vmul.f32 %v207, %v229
        %v231 = vmul.f32 %v210, %v229
        %v232 = vmul.f32 %v213, %v229
        %v233 = vmul.f32 %v216, %v229
        %v234 = vmul.f32 %v219, %v229
        %v235 = vmul.f32 %v222, %v229
        %v236 = vmul.f32 %v225, %v229
        %v237 = vmul.f32 %v228, %v229
        %v238 = vld [vmem:[%s1] sm:$0xff]
        %v239 = vld [vmem:[%s1 + $0x8] sm:$0xff]
        %v240 = vld [vmem:[%s1 + $0x10] sm:$0xff]
        %v241 = vld [vmem:[%s1 + $0x18] sm:$0xff]
        %v242 = vld [vmem:[%s1 + $0x20] sm:$0xff]
        %v243 = vld [vmem:[%s1 + $0x28] sm:$0xff]
        %v244 = vld [vmem:[%s1 + $0x30] sm:$0xff]
        %v245 = vld [vmem:[%s1 + $0x38] sm:$0xff]
        %v254 = vlaneseq
        %v255 = vand.u32 %v254, 127
        %v256 = vlaneseq
        %v257 = vshrl.u32 %v256, 7
        %v258 = vsub.s32 %v255, %v257
        %v259 = vrot.slane %v230, %v258
        %v260 = vadd.s32 %v255, 4294967288
        %v261 = vlaneseq
        %v262 = vshrl.u32 %v261, 7
        %v263 = vsub.s32 %v260, %v262
        %v264 = vrot.slane %v231, %v263
        %vm265 = vcmask 130112
        %v266 = vsel %vm265, %v264, %v259
        %v267 = vadd.s32 %v255, 4294967280
        %v268 = vlaneseq
        %v269 = vshrl.u32 %v268, 7
        %v270 = vsub.s32 %v267, %v269
        %v271 = vrot.slane %v232, %v270
        %vm272 = vcmask 195712
        %v273 = vsel %vm272, %v271, %v266
        %v274 = vadd.s32 %v255, 4294967272
        %v275 = vlaneseq
        %v276 = vshrl.u32 %v275, 7
        %v277 = vsub.s32 %v274, %v276
        %v278 = vrot.slane %v233, %v277
        %vm279 = vcmask 261312
        %v280 = vsel %vm279, %v278, %v273
        %v281 = vadd.s32 %v255, 4294967264
        %v282 = vlaneseq
        %v283 = vshrl.u32 %v282, 7
        %v284 = vsub.s32 %v281, %v283
        %v285 = vrot.slane %v234, %v284
        %vm286 = vcmask 326912
        %v287 = vsel %vm286, %v285, %v280
        %v288 = vadd.s32 %v255, 4294967256
        %v289 = vlaneseq
        %v290 = vshrl.u32 %v289, 7
        %v291 = vsub.s32 %v288, %v290
        %v292 = vrot.slane %v235, %v291
        %vm293 = vcmask 392512
        %v294 = vsel %vm293, %v292, %v287
        %v295 = vadd.s32 %v255, 4294967248
        %v296 = vlaneseq
        %v297 = vshrl.u32 %v296, 7
        %v298 = vsub.s32 %v295, %v297
        %v299 = vrot.slane %v236, %v298
        %vm300 = vcmask 458112
        %v301 = vsel %vm300, %v299, %v294
        %v302 = vadd.s32 %v255, 4294967240
        %v303 = vlaneseq
        %v304 = vshrl.u32 %v303, 7
        %v305 = vsub.s32 %v302, %v304
        %v306 = vrot.slane %v237, %v305
        %vm307 = vcmask 523712
        %v308 = vsel %vm307, %v306, %v301
        %vm309 = vcmask 523264
        %v310 = vsel %vm309, %v308, 0
        %312 = vmatprep.subr.mxu0 0.0
        %313 = vmatpush1.msra.mxu0 0.0
        %314 = vmatprep.subr.mxu0 0.0
        %315 = vmatpush1.msra.mxu0 0.0
        %316 = vmatprep.subr.mxu0 0.0
        %317 = vmatpush1.msra.mxu0 0.0
        %318 = vmatprep.subr.mxu0 0.0
        %319 = vmatpush1.msra.mxu0 0.0
        %320 = vmatprep.subr.mxu0 0.0
        %321 = vmatpush1.msra.mxu0 0.0
        %322 = vmatprep.subr.mxu0 0.0
        %323 = vmatpush1.msra.mxu0 0.0
        %324 = vmatprep.subr.mxu0 0.0
        %325 = vmatpush1.msra.mxu0 0.0
        %326 = vmatprep.subr.mxu0 0.0
        %327 = vmatpush1.msra.mxu0 0.0
        %328 = vmatprep.subr.mxu0 0.0
        %v329 = vand.u32 %v245, 4294901760
        %330 = vmatpush1.msra.mxu0 %v329
        %331 = vmatprep.subr.mxu0 0.0
        %v332 = vand.u32 %v244, 4294901760
        %333 = vmatpush1.msra.mxu0 %v332
        %334 = vmatprep.subr.mxu0 0.0
        %v335 = vand.u32 %v243, 4294901760
        %336 = vmatpush1.msra.mxu0 %v335
        %337 = vmatprep.subr.mxu0 0.0
        %v338 = vand.u32 %v242, 4294901760
        %339 = vmatpush1.msra.mxu0 %v338
        %340 = vmatprep.subr.mxu0 0.0
        %v341 = vand.u32 %v241, 4294901760
        %342 = vmatpush1.msra.mxu0 %v341
        %343 = vmatprep.subr.mxu0 0.0
        %v344 = vand.u32 %v240, 4294901760
        %345 = vmatpush1.msra.mxu0 %v344
        %346 = vmatprep.subr.mxu0 0.0
        %v347 = vand.u32 %v239, 4294901760
        %348 = vmatpush1.msra.mxu0 %v347
        %349 = vmatprep.subr.mxu0 0.0
        %v350 = vand.u32 %v238, 4294901760
        %351 = vmatpush1.msra.mxu0 %v350
        %352 = vmatprep.subr.mxu0 0.0
        %353 = vmatpush2.msra.mxu0 0.0
        %354 = vmatprep.subr.mxu0 0.0
        %355 = vmatpush2.msra.mxu0 0.0
        %356 = vmatprep.subr.mxu0 0.0
        %357 = vmatpush2.msra.mxu0 0.0
        %358 = vmatprep.subr.mxu0 0.0
        %359 = vmatpush2.msra.mxu0 0.0
        %360 = vmatprep.subr.mxu0 0.0
        %361 = vmatpush2.msra.mxu0 0.0
        %362 = vmatprep.subr.mxu0 0.0
        %363 = vmatpush2.msra.mxu0 0.0
        %364 = vmatprep.subr.mxu0 0.0
        %365 = vmatpush2.msra.mxu0 0.0
        %366 = vmatprep.subr.mxu0 0.0
        %367 = vmatpush2.msra.mxu0 0.0
        %368 = vmatprep.subr.mxu0 0.0
        %369 = vmatpush2.msra.mxu0 0.0
        %370 = vmatprep.subr.mxu0 0.0
        %371 = vmatpush2.msra.mxu0 0.0
        %372 = vmatprep.subr.mxu0 0.0
        %373 = vmatpush2.msra.mxu0 0.0
        %374 = vmatprep.subr.mxu0 0.0
        %375 = vmatpush2.msra.mxu0 0.0
        %376 = vmatprep.subr.mxu0 0.0
        %377 = vmatpush2.msra.mxu0 0.0
        %378 = vmatprep.subr.mxu0 0.0
        %379 = vmatpush2.msra.mxu0 0.0
        %380 = vmatprep.subr.mxu0 0.0
        %381 = vmatpush2.msra.mxu0 0.0
        %382 = vmatprep.subr.mxu0 0.0
        %383 = vmatpush2.msra.mxu0 0.0
        %384 = vmatprep.mubr.f32.mxu0 0.0
        %v385 = vand.u32 %v310, 4294901760
        %v386 = vsub.f32 %v310, %v385
        %v387 = vand.u32 %v386, 4294901760
        %v388 = vsub.f32 %v386, %v387
        %v389 = vand.u32 %v388, 4294901760
        %390 = vmatmul.mubr.f32.gmra.mxu0 %v389
        %v391 = vpop.f32.mrf.mxu0
        %v392 = vadd.f32 0.0, %v391
        %v393 = vpop.f32.mrf.mxu0
        %394 = vdwg.mxu0
        %395 = vmatprep.subr.mxu0 0.0
        %396 = vmatpush1.msra.mxu0 0.0
        %397 = vmatprep.subr.mxu0 0.0
        %398 = vmatpush1.msra.mxu0 0.0
        %399 = vmatprep.subr.mxu0 0.0
        %400 = vmatpush1.msra.mxu0 0.0
        %401 = vmatprep.subr.mxu0 0.0
        %402 = vmatpush1.msra.mxu0 0.0
        %403 = vmatprep.subr.mxu0 0.0
        %404 = vmatpush1.msra.mxu0 0.0
        %405 = vmatprep.subr.mxu0 0.0
        %406 = vmatpush1.msra.mxu0 0.0
        %407 = vmatprep.subr.mxu0 0.0
        %408 = vmatpush1.msra.mxu0 0.0
        %409 = vmatprep.subr.mxu0 0.0
        %410 = vmatpush1.msra.mxu0 0.0
        %411 = vmatprep.subr.mxu0 0.0
        %v412 = vand.u32 %v245, 4294901760
        %v413 = vsub.f32 %v245, %v412
        %v414 = vand.u32 %v413, 4294901760
        %v415 = vsub.f32 %v413, %v414
        %v416 = vand.u32 %v415, 4294901760
        %417 = vmatpush1.msra.mxu0 %v416
        %418 = vmatprep.subr.mxu0 0.0
        %v419 = vand.u32 %v244, 4294901760
        %v420 = vsub.f32 %v244, %v419
        %v421 = vand.u32 %v420, 4294901760
        %v422 = vsub.f32 %v420, %v421
        %v423 = vand.u32 %v422, 4294901760
        %424 = vmatpush1.msra.mxu0 %v423
        %425 = vmatprep.subr.mxu0 0.0
        %v426 = vand.u32 %v243, 4294901760
        %v427 = vsub.f32 %v243, %v426
        %v428 = vand.u32 %v427, 4294901760
        %v429 = vsub.f32 %v427, %v428
        %v430 = vand.u32 %v429, 4294901760
        %431 = vmatpush1.msra.mxu0 %v430
        %432 = vmatprep.subr.mxu0 0.0
        %v433 = vand.u32 %v242, 4294901760
        %v434 = vsub.f32 %v242, %v433
        %v435 = vand.u32 %v434, 4294901760
        %v436 = vsub.f32 %v434, %v435
        %v437 = vand.u32 %v436, 4294901760
        %438 = vmatpush1.msra.mxu0 %v437
        %439 = vmatprep.subr.mxu0 0.0
        %v440 = vand.u32 %v241, 4294901760
        %v441 = vsub.f32 %v241, %v440
        %v442 = vand.u32 %v441, 4294901760
        %v443 = vsub.f32 %v441, %v442
        %v444 = vand.u32 %v443, 4294901760
        %445 = vmatpush1.msra.mxu0 %v444
        %446 = vmatprep.subr.mxu0 0.0
        %v447 = vand.u32 %v240, 4294901760
        %v448 = vsub.f32 %v240, %v447
        %v449 = vand.u32 %v448, 4294901760
        %v450 = vsub.f32 %v448, %v449
        %v451 = vand.u32 %v450, 4294901760
        %452 = vmatpush1.msra.mxu0 %v451
        %453 = vmatprep.subr.mxu0 0.0
        %v454 = vand.u32 %v239, 4294901760
        %v455 = vsub.f32 %v239, %v454
        %v456 = vand.u32 %v455, 4294901760
        %v457 = vsub.f32 %v455, %v456
        %v458 = vand.u32 %v457, 4294901760
        %459 = vmatpush1.msra.mxu0 %v458
        %460 = vmatprep.subr.mxu0 0.0
        %v461 = vand.u32 %v238, 4294901760
        %v462 = vsub.f32 %v238, %v461
        %v463 = vand.u32 %v462, 4294901760
        %v464 = vsub.f32 %v462, %v463
        %v465 = vand.u32 %v464, 4294901760
        %466 = vmatpush1.msra.mxu0 %v465
        %467 = vmatprep.subr.mxu0 0.0
        %468 = vmatpush2.msra.mxu0 0.0
        %469 = vmatprep.subr.mxu0 0.0
        %470 = vmatpush2.msra.mxu0 0.0
        %471 = vmatprep.subr.mxu0 0.0
        %472 = vmatpush2.msra.mxu0 0.0
        %473 = vmatprep.subr.mxu0 0.0
        %474 = vmatpush2.msra.mxu0 0.0
        %475 = vmatprep.subr.mxu0 0.0
        %476 = vmatpush2.msra.mxu0 0.0
        %477 = vmatprep.subr.mxu0 0.0
        %478 = vmatpush2.msra.mxu0 0.0
        %479 = vmatprep.subr.mxu0 0.0
        %480 = vmatpush2.msra.mxu0 0.0
        %481 = vmatprep.subr.mxu0 0.0
        %482 = vmatpush2.msra.mxu0 0.0
        %483 = vmatprep.subr.mxu0 0.0
        %484 = vmatpush2.msra.mxu0 0.0
        %485 = vmatprep.subr.mxu0 0.0
        %486 = vmatpush2.msra.mxu0 0.0
        %487 = vmatprep.subr.mxu0 0.0
        %488 = vmatpush2.msra.mxu0 0.0
        %489 = vmatprep.subr.mxu0 0.0
        %490 = vmatpush2.msra.mxu0 0.0
        %491 = vmatprep.subr.mxu0 0.0
        %492 = vmatpush2.msra.mxu0 0.0
        %493 = vmatprep.subr.mxu0 0.0
        %494 = vmatpush2.msra.mxu0 0.0
        %495 = vmatprep.subr.mxu0 0.0
        %496 = vmatpush2.msra.mxu0 0.0
        %497 = vmatprep.subr.mxu0 0.0
        %498 = vmatpush2.msra.mxu0 0.0
        %499 = vmatprep.mubr.f32.mxu0 0.0
        %v500 = vand.u32 %v310, 4294901760
        %501 = vmatmul.mubr.f32.gmra.mxu0 %v500
        %v502 = vpop.f32.mrf.mxu0
        %v503 = vadd.f32 %v392, %v502
        %v504 = vpop.f32.mrf.mxu0
        %505 = vdwg.mxu0
        %506 = vmatprep.subr.mxu0 0.0
        %507 = vmatpush1.msra.mxu0 0.0
        %508 = vmatprep.subr.mxu0 0.0
        %509 = vmatpush1.msra.mxu0 0.0
        %510 = vmatprep.subr.mxu0 0.0
        %511 = vmatpush1.msra.mxu0 0.0
        %512 = vmatprep.subr.mxu0 0.0
        %513 = vmatpush1.msra.mxu0 0.0
        %514 = vmatprep.subr.mxu0 0.0
        %515 = vmatpush1.msra.mxu0 0.0
        %516 = vmatprep.subr.mxu0 0.0
        %517 = vmatpush1.msra.mxu0 0.0
        %518 = vmatprep.subr.mxu0 0.0
        %519 = vmatpush1.msra.mxu0 0.0
        %520 = vmatprep.subr.mxu0 0.0
        %521 = vmatpush1.msra.mxu0 0.0
        %522 = vmatprep.subr.mxu0 0.0
        %v523 = vand.u32 %v245, 4294901760
        %v524 = vsub.f32 %v245, %v523
        %525 = vmatpush1.msra.mxu0 %v524
        %526 = vmatprep.subr.mxu0 0.0
        %v527 = vand.u32 %v244, 4294901760
        %v528 = vsub.f32 %v244, %v527
        %529 = vmatpush1.msra.mxu0 %v528
        %530 = vmatprep.subr.mxu0 0.0
        %v531 = vand.u32 %v243, 4294901760
        %v532 = vsub.f32 %v243, %v531
        %533 = vmatpush1.msra.mxu0 %v532
        %534 = vmatprep.subr.mxu0 0.0
        %v535 = vand.u32 %v242, 4294901760
        %v536 = vsub.f32 %v242, %v535
        %537 = vmatpush1.msra.mxu0 %v536
        %538 = vmatprep.subr.mxu0 0.0
        %v539 = vand.u32 %v241, 4294901760
        %v540 = vsub.f32 %v241, %v539
        %541 = vmatpush1.msra.mxu0 %v540
        %542 = vmatprep.subr.mxu0 0.0
        %v543 = vand.u32 %v240, 4294901760
        %v544 = vsub.f32 %v240, %v543
        %545 = vmatpush1.msra.mxu0 %v544
        %546 = vmatprep.subr.mxu0 0.0
        %v547 = vand.u32 %v239, 4294901760
        %v548 = vsub.f32 %v239, %v547
        %549 = vmatpush1.msra.mxu0 %v548
        %550 = vmatprep.subr.mxu0 0.0
        %v551 = vand.u32 %v238, 4294901760
        %v552 = vsub.f32 %v238, %v551
        %553 = vmatpush1.msra.mxu0 %v552
        %554 = vmatprep.subr.mxu0 0.0
        %555 = vmatpush2.msra.mxu0 0.0
        %556 = vmatprep.subr.mxu0 0.0
        %557 = vmatpush2.msra.mxu0 0.0
        %558 = vmatprep.subr.mxu0 0.0
        %559 = vmatpush2.msra.mxu0 0.0
        %560 = vmatprep.subr.mxu0 0.0
        %561 = vmatpush2.msra.mxu0 0.0
        %562 = vmatprep.subr.mxu0 0.0
        %563 = vmatpush2.msra.mxu0 0.0
        %564 = vmatprep.subr.mxu0 0.0
        %565 = vmatpush2.msra.mxu0 0.0
        %566 = vmatprep.subr.mxu0 0.0
        %567 = vmatpush2.msra.mxu0 0.0
        %568 = vmatprep.subr.mxu0 0.0
        %569 = vmatpush2.msra.mxu0 0.0
        %570 = vmatprep.subr.mxu0 0.0
        %571 = vmatpush2.msra.mxu0 0.0
        %572 = vmatprep.subr.mxu0 0.0
        %573 = vmatpush2.msra.mxu0 0.0
        %574 = vmatprep.subr.mxu0 0.0
        %575 = vmatpush2.msra.mxu0 0.0
        %576 = vmatprep.subr.mxu0 0.0
        %577 = vmatpush2.msra.mxu0 0.0
        %578 = vmatprep.subr.mxu0 0.0
        %579 = vmatpush2.msra.mxu0 0.0
        %580 = vmatprep.subr.mxu0 0.0
        %581 = vmatpush2.msra.mxu0 0.0
        %582 = vmatprep.subr.mxu0 0.0
        %583 = vmatpush2.msra.mxu0 0.0
        %584 = vmatprep.subr.mxu0 0.0
        %585 = vmatpush2.msra.mxu0 0.0
        %586 = vmatprep.mubr.f32.mxu0 0.0
        %v587 = vand.u32 %v310, 4294901760
        %v588 = vsub.f32 %v310, %v587
        %589 = vmatmul.mubr.f32.gmra.mxu0 %v588
        %v590 = vpop.f32.mrf.mxu0
        %v591 = vadd.f32 %v503, %v590
        %v592 = vpop.f32.mrf.mxu0
        %593 = vdwg.mxu0
        %594 = vmatprep.subr.mxu0 0.0
        %595 = vmatpush1.msra.mxu0 0.0
        %596 = vmatprep.subr.mxu0 0.0
        %597 = vmatpush1.msra.mxu0 0.0
        %598 = vmatprep.subr.mxu0 0.0
        %599 = vmatpush1.msra.mxu0 0.0
        %600 = vmatprep.subr.mxu0 0.0
        %601 = vmatpush1.msra.mxu0 0.0
        %602 = vmatprep.subr.mxu0 0.0
        %603 = vmatpush1.msra.mxu0 0.0
        %604 = vmatprep.subr.mxu0 0.0
        %605 = vmatpush1.msra.mxu0 0.0
        %606 = vmatprep.subr.mxu0 0.0
        %607 = vmatpush1.msra.mxu0 0.0
        %608 = vmatprep.subr.mxu0 0.0
        %609 = vmatpush1.msra.mxu0 0.0
        %610 = vmatprep.subr.mxu0 0.0
        %v611 = vand.u32 %v245, 4294901760
        %612 = vmatpush1.msra.mxu0 %v611
        %613 = vmatprep.subr.mxu0 0.0
        %v614 = vand.u32 %v244, 4294901760
        %615 = vmatpush1.msra.mxu0 %v614
        %616 = vmatprep.subr.mxu0 0.0
        %v617 = vand.u32 %v243, 4294901760
        %618 = vmatpush1.msra.mxu0 %v617
        %619 = vmatprep.subr.mxu0 0.0
        %v620 = vand.u32 %v242, 4294901760
        %621 = vmatpush1.msra.mxu0 %v620
        %622 = vmatprep.subr.mxu0 0.0
        %v623 = vand.u32 %v241, 4294901760
        %624 = vmatpush1.msra.mxu0 %v623
        %625 = vmatprep.subr.mxu0 0.0
        %v626 = vand.u32 %v240, 4294901760
        %627 = vmatpush1.msra.mxu0 %v626
        %628 = vmatprep.subr.mxu0 0.0
        %v629 = vand.u32 %v239, 4294901760
        %630 = vmatpush1.msra.mxu0 %v629
        %631 = vmatprep.subr.mxu0 0.0
        %v632 = vand.u32 %v238, 4294901760
        %633 = vmatpush1.msra.mxu0 %v632
        %634 = vmatprep.subr.mxu0 0.0
        %635 = vmatpush2.msra.mxu0 0.0
        %636 = vmatprep.subr.mxu0 0.0
        %637 = vmatpush2.msra.mxu0 0.0
        %638 = vmatprep.subr.mxu0 0.0
        %639 = vmatpush2.msra.mxu0 0.0
        %640 = vmatprep.subr.mxu0 0.0
        %641 = vmatpush2.msra.mxu0 0.0
        %642 = vmatprep.subr.mxu0 0.0
        %643 = vmatpush2.msra.mxu0 0.0
        %644 = vmatprep.subr.mxu0 0.0
        %645 = vmatpush2.msra.mxu0 0.0
        %646 = vmatprep.subr.mxu0 0.0
        %647 = vmatpush2.msra.mxu0 0.0
        %648 = vmatprep.subr.mxu0 0.0
        %649 = vmatpush2.msra.mxu0 0.0
        %650 = vmatprep.subr.mxu0 0.0
        %651 = vmatpush2.msra.mxu0 0.0
        %652 = vmatprep.subr.mxu0 0.0
        %653 = vmatpush2.msra.mxu0 0.0
        %654 = vmatprep.subr.mxu0 0.0
        %655 = vmatpush2.msra.mxu0 0.0
        %656 = vmatprep.subr.mxu0 0.0
        %657 = vmatpush2.msra.mxu0 0.0
        %658 = vmatprep.subr.mxu0 0.0
        %659 = vmatpush2.msra.mxu0 0.0
        %660 = vmatprep.subr.mxu0 0.0
        %661 = vmatpush2.msra.mxu0 0.0
        %662 = vmatprep.subr.mxu0 0.0
        %663 = vmatpush2.msra.mxu0 0.0
        %664 = vmatprep.subr.mxu0 0.0
        %665 = vmatpush2.msra.mxu0 0.0
        %666 = vmatprep.mubr.f32.mxu0 0.0
        %v667 = vand.u32 %v310, 4294901760
        %v668 = vsub.f32 %v310, %v667
        %v669 = vand.u32 %v668, 4294901760
        %670 = vmatmul.mubr.f32.gmra.mxu0 %v669
        %v671 = vpop.f32.mrf.mxu0
        %v672 = vadd.f32 %v591, %v671
        %v673 = vpop.f32.mrf.mxu0
        %674 = vdwg.mxu0
        %675 = vmatprep.subr.mxu0 0.0
        %676 = vmatpush1.msra.mxu0 0.0
        %677 = vmatprep.subr.mxu0 0.0
        %678 = vmatpush1.msra.mxu0 0.0
        %679 = vmatprep.subr.mxu0 0.0
        %680 = vmatpush1.msra.mxu0 0.0
        %681 = vmatprep.subr.mxu0 0.0
        %682 = vmatpush1.msra.mxu0 0.0
        %683 = vmatprep.subr.mxu0 0.0
        %684 = vmatpush1.msra.mxu0 0.0
        %685 = vmatprep.subr.mxu0 0.0
        %686 = vmatpush1.msra.mxu0 0.0
        %687 = vmatprep.subr.mxu0 0.0
        %688 = vmatpush1.msra.mxu0 0.0
        %689 = vmatprep.subr.mxu0 0.0
        %690 = vmatpush1.msra.mxu0 0.0
        %691 = vmatprep.subr.mxu0 0.0
        %v692 = vand.u32 %v245, 4294901760
        %v693 = vsub.f32 %v245, %v692
        %v694 = vand.u32 %v693, 4294901760
        %695 = vmatpush1.msra.mxu0 %v694
        %696 = vmatprep.subr.mxu0 0.0
        %v697 = vand.u32 %v244, 4294901760
        %v698 = vsub.f32 %v244, %v697
        %v699 = vand.u32 %v698, 4294901760
        %700 = vmatpush1.msra.mxu0 %v699
        %701 = vmatprep.subr.mxu0 0.0
        %v702 = vand.u32 %v243, 4294901760
        %v703 = vsub.f32 %v243, %v702
        %v704 = vand.u32 %v703, 4294901760
        %705 = vmatpush1.msra.mxu0 %v704
        %706 = vmatprep.subr.mxu0 0.0
        %v707 = vand.u32 %v242, 4294901760
        %v708 = vsub.f32 %v242, %v707
        %v709 = vand.u32 %v708, 4294901760
        %710 = vmatpush1.msra.mxu0 %v709
        %711 = vmatprep.subr.mxu0 0.0
        %v712 = vand.u32 %v241, 4294901760
        %v713 = vsub.f32 %v241, %v712
        %v714 = vand.u32 %v713, 4294901760
        %715 = vmatpush1.msra.mxu0 %v714
        %716 = vmatprep.subr.mxu0 0.0
        %v717 = vand.u32 %v240, 4294901760
        %v718 = vsub.f32 %v240, %v717
        %v719 = vand.u32 %v718, 4294901760
        %720 = vmatpush1.msra.mxu0 %v719
        %721 = vmatprep.subr.mxu0 0.0
        %v722 = vand.u32 %v239, 4294901760
        %v723 = vsub.f32 %v239, %v722
        %v724 = vand.u32 %v723, 4294901760
        %725 = vmatpush1.msra.mxu0 %v724
        %726 = vmatprep.subr.mxu0 0.0
        %v727 = vand.u32 %v238, 4294901760
        %v728 = vsub.f32 %v238, %v727
        %v729 = vand.u32 %v728, 4294901760
        %730 = vmatpush1.msra.mxu0 %v729
        %731 = vmatprep.subr.mxu0 0.0
        %732 = vmatpush2.msra.mxu0 0.0
        %733 = vmatprep.subr.mxu0 0.0
        %734 = vmatpush2.msra.mxu0 0.0
        %735 = vmatprep.subr.mxu0 0.0
        %736 = vmatpush2.msra.mxu0 0.0
        %737 = vmatprep.subr.mxu0 0.0
        %738 = vmatpush2.msra.mxu0 0.0
        %739 = vmatprep.subr.mxu0 0.0
        %740 = vmatpush2.msra.mxu0 0.0
        %741 = vmatprep.subr.mxu0 0.0
        %742 = vmatpush2.msra.mxu0 0.0
        %743 = vmatprep.subr.mxu0 0.0
        %744 = vmatpush2.msra.mxu0 0.0
        %745 = vmatprep.subr.mxu0 0.0
        %746 = vmatpush2.msra.mxu0 0.0
        %747 = vmatprep.subr.mxu0 0.0
        %748 = vmatpush2.msra.mxu0 0.0
        %749 = vmatprep.subr.mxu0 0.0
        %750 = vmatpush2.msra.mxu0 0.0
        %751 = vmatprep.subr.mxu0 0.0
        %752 = vmatpush2.msra.mxu0 0.0
        %753 = vmatprep.subr.mxu0 0.0
        %754 = vmatpush2.msra.mxu0 0.0
        %755 = vmatprep.subr.mxu0 0.0
        %756 = vmatpush2.msra.mxu0 0.0
        %757 = vmatprep.subr.mxu0 0.0
        %758 = vmatpush2.msra.mxu0 0.0
        %759 = vmatprep.subr.mxu0 0.0
        %760 = vmatpush2.msra.mxu0 0.0
        %761 = vmatprep.subr.mxu0 0.0
        %762 = vmatpush2.msra.mxu0 0.0
        %763 = vmatprep.mubr.f32.mxu0 0.0
        %v764 = vand.u32 %v310, 4294901760
        %765 = vmatmul.mubr.f32.gmra.mxu0 %v764
        %v766 = vpop.f32.mrf.mxu0
        %v767 = vadd.f32 %v672, %v766
        %v768 = vpop.f32.mrf.mxu0
        %769 = vdwg.mxu0
        %770 = vmatprep.subr.mxu0 0.0
        %771 = vmatpush1.msra.mxu0 0.0
        %772 = vmatprep.subr.mxu0 0.0
        %773 = vmatpush1.msra.mxu0 0.0
        %774 = vmatprep.subr.mxu0 0.0
        %775 = vmatpush1.msra.mxu0 0.0
        %776 = vmatprep.subr.mxu0 0.0
        %777 = vmatpush1.msra.mxu0 0.0
        %778 = vmatprep.subr.mxu0 0.0
        %779 = vmatpush1.msra.mxu0 0.0
        %780 = vmatprep.subr.mxu0 0.0
        %781 = vmatpush1.msra.mxu0 0.0
        %782 = vmatprep.subr.mxu0 0.0
        %783 = vmatpush1.msra.mxu0 0.0
        %784 = vmatprep.subr.mxu0 0.0
        %785 = vmatpush1.msra.mxu0 0.0
        %786 = vmatprep.subr.mxu0 0.0
        %v787 = vand.u32 %v245, 4294901760
        %788 = vmatpush1.msra.mxu0 %v787
        %789 = vmatprep.subr.mxu0 0.0
        %v790 = vand.u32 %v244, 4294901760
        %791 = vmatpush1.msra.mxu0 %v790
        %792 = vmatprep.subr.mxu0 0.0
        %v793 = vand.u32 %v243, 4294901760
        %794 = vmatpush1.msra.mxu0 %v793
        %795 = vmatprep.subr.mxu0 0.0
        %v796 = vand.u32 %v242, 4294901760
        %797 = vmatpush1.msra.mxu0 %v796
        %798 = vmatprep.subr.mxu0 0.0
        %v799 = vand.u32 %v241, 4294901760
        %800 = vmatpush1.msra.mxu0 %v799
        %801 = vmatprep.subr.mxu0 0.0
        %v802 = vand.u32 %v240, 4294901760
        %803 = vmatpush1.msra.mxu0 %v802
        %804 = vmatprep.subr.mxu0 0.0
        %v805 = vand.u32 %v239, 4294901760
        %806 = vmatpush1.msra.mxu0 %v805
        %807 = vmatprep.subr.mxu0 0.0
        %v808 = vand.u32 %v238, 4294901760
        %809 = vmatpush1.msra.mxu0 %v808
        %810 = vmatprep.subr.mxu0 0.0
        %811 = vmatpush2.msra.mxu0 0.0
        %812 = vmatprep.subr.mxu0 0.0
        %813 = vmatpush2.msra.mxu0 0.0
        %814 = vmatprep.subr.mxu0 0.0
        %815 = vmatpush2.msra.mxu0 0.0
        %816 = vmatprep.subr.mxu0 0.0
        %817 = vmatpush2.msra.mxu0 0.0
        %818 = vmatprep.subr.mxu0 0.0
        %819 = vmatpush2.msra.mxu0 0.0
        %820 = vmatprep.subr.mxu0 0.0
        %821 = vmatpush2.msra.mxu0 0.0
        %822 = vmatprep.subr.mxu0 0.0
        %823 = vmatpush2.msra.mxu0 0.0
        %824 = vmatprep.subr.mxu0 0.0
        %825 = vmatpush2.msra.mxu0 0.0
        %826 = vmatprep.subr.mxu0 0.0
        %827 = vmatpush2.msra.mxu0 0.0
        %828 = vmatprep.subr.mxu0 0.0
        %829 = vmatpush2.msra.mxu0 0.0
        %830 = vmatprep.subr.mxu0 0.0
        %831 = vmatpush2.msra.mxu0 0.0
        %832 = vmatprep.subr.mxu0 0.0
        %833 = vmatpush2.msra.mxu0 0.0
        %834 = vmatprep.subr.mxu0 0.0
        %835 = vmatpush2.msra.mxu0 0.0
        %836 = vmatprep.subr.mxu0 0.0
        %837 = vmatpush2.msra.mxu0 0.0
        %838 = vmatprep.subr.mxu0 0.0
        %839 = vmatpush2.msra.mxu0 0.0
        %840 = vmatprep.subr.mxu0 0.0
        %841 = vmatpush2.msra.mxu0 0.0
        %842 = vmatprep.mubr.f32.mxu0 0.0
        %v843 = vand.u32 %v310, 4294901760
        %844 = vmatmul.mubr.f32.gmra.mxu0 %v843
        %v845 = vpop.f32.mrf.mxu0
        %v846 = vadd.f32 %v767, %v845
        %v847 = vpop.f32.mrf.mxu0
        %848 = vdwg.mxu0
        %v849 = vmax.f32 %v846, 0.0
        %v850 = vld [vmem:[%s2] sm:$0xf]
        %vm851 = vcmask 31744
        %v853 = vsel %vm851, %v849, 0
        %vm855 = vcmask 1043456
        %v857 = vsel %vm855, %v850, 0
        %859 = vmatprep.subr.mxu0 0.0
        %860 = vmatpush1.msra.mxu0 0.0
        %861 = vmatprep.subr.mxu0 0.0
        %862 = vmatpush1.msra.mxu0 0.0
        %863 = vmatprep.subr.mxu0 0.0
        %864 = vmatpush1.msra.mxu0 0.0
        %865 = vmatprep.subr.mxu0 0.0
        %866 = vmatpush1.msra.mxu0 0.0
        %867 = vmatprep.subr.mxu0 0.0
        %868 = vmatpush1.msra.mxu0 0.0
        %869 = vmatprep.subr.mxu0 0.0
        %870 = vmatpush1.msra.mxu0 0.0
        %871 = vmatprep.subr.mxu0 0.0
        %872 = vmatpush1.msra.mxu0 0.0
        %873 = vmatprep.subr.mxu0 0.0
        %874 = vmatpush1.msra.mxu0 0.0
        %875 = vmatprep.subr.mxu0 0.0
        %876 = vmatpush1.msra.mxu0 0.0
        %877 = vmatprep.subr.mxu0 0.0
        %878 = vmatpush1.msra.mxu0 0.0
        %879 = vmatprep.subr.mxu0 0.0
        %880 = vmatpush1.msra.mxu0 0.0
        %881 = vmatprep.subr.mxu0 0.0
        %882 = vmatpush1.msra.mxu0 0.0
        %883 = vmatprep.subr.mxu0 0.0
        %884 = vmatpush1.msra.mxu0 0.0
        %885 = vmatprep.subr.mxu0 0.0
        %886 = vmatpush1.msra.mxu0 0.0
        %887 = vmatprep.subr.mxu0 0.0
        %888 = vmatpush1.msra.mxu0 0.0
        %889 = vmatprep.subr.mxu0 0.0
        %v890 = vand.u32 %v857, 4294901760
        %891 = vmatpush1.msra.mxu0 %v890
        %892 = vmatprep.subr.mxu0 0.0
        %893 = vmatpush2.msra.mxu0 0.0
        %894 = vmatprep.subr.mxu0 0.0
        %895 = vmatpush2.msra.mxu0 0.0
        %896 = vmatprep.subr.mxu0 0.0
        %897 = vmatpush2.msra.mxu0 0.0
        %898 = vmatprep.subr.mxu0 0.0
        %899 = vmatpush2.msra.mxu0 0.0
        %900 = vmatprep.subr.mxu0 0.0
        %901 = vmatpush2.msra.mxu0 0.0
        %902 = vmatprep.subr.mxu0 0.0
        %903 = vmatpush2.msra.mxu0 0.0
        %904 = vmatprep.subr.mxu0 0.0
        %905 = vmatpush2.msra.mxu0 0.0
        %906 = vmatprep.subr.mxu0 0.0
        %907 = vmatpush2.msra.mxu0 0.0
        %908 = vmatprep.subr.mxu0 0.0
        %909 = vmatpush2.msra.mxu0 0.0
        %910 = vmatprep.subr.mxu0 0.0
        %911 = vmatpush2.msra.mxu0 0.0
        %912 = vmatprep.subr.mxu0 0.0
        %913 = vmatpush2.msra.mxu0 0.0
        %914 = vmatprep.subr.mxu0 0.0
        %915 = vmatpush2.msra.mxu0 0.0
        %916 = vmatprep.subr.mxu0 0.0
        %917 = vmatpush2.msra.mxu0 0.0
        %918 = vmatprep.subr.mxu0 0.0
        %919 = vmatpush2.msra.mxu0 0.0
        %920 = vmatprep.subr.mxu0 0.0
        %921 = vmatpush2.msra.mxu0 0.0
        %922 = vmatprep.subr.mxu0 0.0
        %923 = vmatpush2.msra.mxu0 0.0
        %924 = vmatprep.mubr.f32.mxu0 0.0
        %v925 = vand.u32 %v853, 4294901760
        %v926 = vsub.f32 %v853, %v925
        %v927 = vand.u32 %v926, 4294901760
        %v928 = vsub.f32 %v926, %v927
        %v929 = vand.u32 %v928, 4294901760
        %930 = vmatmul.mubr.f32.gmra.mxu0 %v929
        %v931 = vpop.f32.mrf.mxu0
        %v932 = vadd.f32 0.0, %v931
        %v933 = vpop.f32.mrf.mxu0
        %934 = vdwg.mxu0
        %935 = vmatprep.subr.mxu0 0.0
        %936 = vmatpush1.msra.mxu0 0.0
        %937 = vmatprep.subr.mxu0 0.0
        %938 = vmatpush1.msra.mxu0 0.0
        %939 = vmatprep.subr.mxu0 0.0
        %940 = vmatpush1.msra.mxu0 0.0
        %941 = vmatprep.subr.mxu0 0.0
        %942 = vmatpush1.msra.mxu0 0.0
        %943 = vmatprep.subr.mxu0 0.0
        %944 = vmatpush1.msra.mxu0 0.0
        %945 = vmatprep.subr.mxu0 0.0
        %946 = vmatpush1.msra.mxu0 0.0
        %947 = vmatprep.subr.mxu0 0.0
        %948 = vmatpush1.msra.mxu0 0.0
        %949 = vmatprep.subr.mxu0 0.0
        %950 = vmatpush1.msra.mxu0 0.0
        %951 = vmatprep.subr.mxu0 0.0
        %952 = vmatpush1.msra.mxu0 0.0
        %953 = vmatprep.subr.mxu0 0.0
        %954 = vmatpush1.msra.mxu0 0.0
        %955 = vmatprep.subr.mxu0 0.0
        %956 = vmatpush1.msra.mxu0 0.0
        %957 = vmatprep.subr.mxu0 0.0
        %958 = vmatpush1.msra.mxu0 0.0
        %959 = vmatprep.subr.mxu0 0.0
        %960 = vmatpush1.msra.mxu0 0.0
        %961 = vmatprep.subr.mxu0 0.0
        %962 = vmatpush1.msra.mxu0 0.0
        %963 = vmatprep.subr.mxu0 0.0
        %964 = vmatpush1.msra.mxu0 0.0
        %965 = vmatprep.subr.mxu0 0.0
        %v966 = vand.u32 %v857, 4294901760
        %v967 = vsub.f32 %v857, %v966
        %v968 = vand.u32 %v967, 4294901760
        %v969 = vsub.f32 %v967, %v968
        %v970 = vand.u32 %v969, 4294901760
        %971 = vmatpush1.msra.mxu0 %v970
        %972 = vmatprep.subr.mxu0 0.0
        %973 = vmatpush2.msra.mxu0 0.0
        %974 = vmatprep.subr.mxu0 0.0
        %975 = vmatpush2.msra.mxu0 0.0
        %976 = vmatprep.subr.mxu0 0.0
        %977 = vmatpush2.msra.mxu0 0.0
        %978 = vmatprep.subr.mxu0 0.0
        %979 = vmatpush2.msra.mxu0 0.0
        %980 = vmatprep.subr.mxu0 0.0
        %981 = vmatpush2.msra.mxu0 0.0
        %982 = vmatprep.subr.mxu0 0.0
        %983 = vmatpush2.msra.mxu0 0.0
        %984 = vmatprep.subr.mxu0 0.0
        %985 = vmatpush2.msra.mxu0 0.0
        %986 = vmatprep.subr.mxu0 0.0
        %987 = vmatpush2.msra.mxu0 0.0
        %988 = vmatprep.subr.mxu0 0.0
        %989 = vmatpush2.msra.mxu0 0.0
        %990 = vmatprep.subr.mxu0 0.0
        %991 = vmatpush2.msra.mxu0 0.0
        %992 = vmatprep.subr.mxu0 0.0
        %993 = vmatpush2.msra.mxu0 0.0
        %994 = vmatprep.subr.mxu0 0.0
        %995 = vmatpush2.msra.mxu0 0.0
        %996 = vmatprep.subr.mxu0 0.0
        %997 = vmatpush2.msra.mxu0 0.0
        %998 = vmatprep.subr.mxu0 0.0
        %999 = vmatpush2.msra.mxu0 0.0
        %1000 = vmatprep.subr.mxu0 0.0
        %1001 = vmatpush2.msra.mxu0 0.0
        %1002 = vmatprep.subr.mxu0 0.0
        %1003 = vmatpush2.msra.mxu0 0.0
        %1004 = vmatprep.mubr.f32.mxu0 0.0
        %v1005 = vand.u32 %v853, 4294901760
        %1006 = vmatmul.mubr.f32.gmra.mxu0 %v1005
        %v1007 = vpop.f32.mrf.mxu0
        %v1008 = vadd.f32 %v932, %v1007
        %v1009 = vpop.f32.mrf.mxu0
        %1010 = vdwg.mxu0
        %1011 = vmatprep.subr.mxu0 0.0
        %1012 = vmatpush1.msra.mxu0 0.0
        %1013 = vmatprep.subr.mxu0 0.0
        %1014 = vmatpush1.msra.mxu0 0.0
        %1015 = vmatprep.subr.mxu0 0.0
        %1016 = vmatpush1.msra.mxu0 0.0
        %1017 = vmatprep.subr.mxu0 0.0
        %1018 = vmatpush1.msra.mxu0 0.0
        %1019 = vmatprep.subr.mxu0 0.0
        %1020 = vmatpush1.msra.mxu0 0.0
        %1021 = vmatprep.subr.mxu0 0.0
        %1022 = vmatpush1.msra.mxu0 0.0
        %1023 = vmatprep.subr.mxu0 0.0
        %1024 = vmatpush1.msra.mxu0 0.0
        %1025 = vmatprep.subr.mxu0 0.0
        %1026 = vmatpush1.msra.mxu0 0.0
        %1027 = vmatprep.subr.mxu0 0.0
        %1028 = vmatpush1.msra.mxu0 0.0
        %1029 = vmatprep.subr.mxu0 0.0
        %1030 = vmatpush1.msra.mxu0 0.0
        %1031 = vmatprep.subr.mxu0 0.0
        %1032 = vmatpush1.msra.mxu0 0.0
        %1033 = vmatprep.subr.mxu0 0.0
        %1034 = vmatpush1.msra.mxu0 0.0
        %1035 = vmatprep.subr.mxu0 0.0
        %1036 = vmatpush1.msra.mxu0 0.0
        %1037 = vmatprep.subr.mxu0 0.0
        %1038 = vmatpush1.msra.mxu0 0.0
        %1039 = vmatprep.subr.mxu0 0.0
        %1040 = vmatpush1.msra.mxu0 0.0
        %1041 = vmatprep.subr.mxu0 0.0
        %v1042 = vand.u32 %v857, 4294901760
        %v1043 = vsub.f32 %v857, %v1042
        %1044 = vmatpush1.msra.mxu0 %v1043
        %1045 = vmatprep.subr.mxu0 0.0
        %1046 = vmatpush2.msra.mxu0 0.0
        %1047 = vmatprep.subr.mxu0 0.0
        %1048 = vmatpush2.msra.mxu0 0.0
        %1049 = vmatprep.subr.mxu0 0.0
        %1050 = vmatpush2.msra.mxu0 0.0
        %1051 = vmatprep.subr.mxu0 0.0
        %1052 = vmatpush2.msra.mxu0 0.0
        %1053 = vmatprep.subr.mxu0 0.0
        %1054 = vmatpush2.msra.mxu0 0.0
        %1055 = vmatprep.subr.mxu0 0.0
        %1056 = vmatpush2.msra.mxu0 0.0
        %1057 = vmatprep.subr.mxu0 0.0
        %1058 = vmatpush2.msra.mxu0 0.0
        %1059 = vmatprep.subr.mxu0 0.0
        %1060 = vmatpush2.msra.mxu0 0.0
        %1061 = vmatprep.subr.mxu0 0.0
        %1062 = vmatpush2.msra.mxu0 0.0
        %1063 = vmatprep.subr.mxu0 0.0
        %1064 = vmatpush2.msra.mxu0 0.0
        %1065 = vmatprep.subr.mxu0 0.0
        %1066 = vmatpush2.msra.mxu0 0.0
        %1067 = vmatprep.subr.mxu0 0.0
        %1068 = vmatpush2.msra.mxu0 0.0
        %1069 = vmatprep.subr.mxu0 0.0
        %1070 = vmatpush2.msra.mxu0 0.0
        %1071 = vmatprep.subr.mxu0 0.0
        %1072 = vmatpush2.msra.mxu0 0.0
        %1073 = vmatprep.subr.mxu0 0.0
        %1074 = vmatpush2.msra.mxu0 0.0
        %1075 = vmatprep.subr.mxu0 0.0
        %1076 = vmatpush2.msra.mxu0 0.0
        %1077 = vmatprep.mubr.f32.mxu0 0.0
        %v1078 = vand.u32 %v853, 4294901760
        %v1079 = vsub.f32 %v853, %v1078
        %1080 = vmatmul.mubr.f32.gmra.mxu0 %v1079
        %v1081 = vpop.f32.mrf.mxu0
        %v1082 = vadd.f32 %v1008, %v1081
        %v1083 = vpop.f32.mrf.mxu0
        %1084 = vdwg.mxu0
        %1085 = vmatprep.subr.mxu0 0.0
        %1086 = vmatpush1.msra.mxu0 0.0
        %1087 = vmatprep.subr.mxu0 0.0
        %1088 = vmatpush1.msra.mxu0 0.0
        %1089 = vmatprep.subr.mxu0 0.0
        %1090 = vmatpush1.msra.mxu0 0.0
        %1091 = vmatprep.subr.mxu0 0.0
        %1092 = vmatpush1.msra.mxu0 0.0
        %1093 = vmatprep.subr.mxu0 0.0
        %1094 = vmatpush1.msra.mxu0 0.0
        %1095 = vmatprep.subr.mxu0 0.0
        %1096 = vmatpush1.msra.mxu0 0.0
        %1097 = vmatprep.subr.mxu0 0.0
        %1098 = vmatpush1.msra.mxu0 0.0
        %1099 = vmatprep.subr.mxu0 0.0
        %1100 = vmatpush1.msra.mxu0 0.0
        %1101 = vmatprep.subr.mxu0 0.0
        %1102 = vmatpush1.msra.mxu0 0.0
        %1103 = vmatprep.subr.mxu0 0.0
        %1104 = vmatpush1.msra.mxu0 0.0
        %1105 = vmatprep.subr.mxu0 0.0
        %1106 = vmatpush1.msra.mxu0 0.0
        %1107 = vmatprep.subr.mxu0 0.0
        %1108 = vmatpush1.msra.mxu0 0.0
        %1109 = vmatprep.subr.mxu0 0.0
        %1110 = vmatpush1.msra.mxu0 0.0
        %1111 = vmatprep.subr.mxu0 0.0
        %1112 = vmatpush1.msra.mxu0 0.0
        %1113 = vmatprep.subr.mxu0 0.0
        %1114 = vmatpush1.msra.mxu0 0.0
        %1115 = vmatprep.subr.mxu0 0.0
        %v1116 = vand.u32 %v857, 4294901760
        %1117 = vmatpush1.msra.mxu0 %v1116
        %1118 = vmatprep.subr.mxu0 0.0
        %1119 = vmatpush2.msra.mxu0 0.0
        %1120 = vmatprep.subr.mxu0 0.0
        %1121 = vmatpush2.msra.mxu0 0.0
        %1122 = vmatprep.subr.mxu0 0.0
        %1123 = vmatpush2.msra.mxu0 0.0
        %1124 = vmatprep.subr.mxu0 0.0
        %1125 = vmatpush2.msra.mxu0 0.0
        %1126 = vmatprep.subr.mxu0 0.0
        %1127 = vmatpush2.msra.mxu0 0.0
        %1128 = vmatprep.subr.mxu0 0.0
        %1129 = vmatpush2.msra.mxu0 0.0
        %1130 = vmatprep.subr.mxu0 0.0
        %1131 = vmatpush2.msra.mxu0 0.0
        %1132 = vmatprep.subr.mxu0 0.0
        %1133 = vmatpush2.msra.mxu0 0.0
        %1134 = vmatprep.subr.mxu0 0.0
        %1135 = vmatpush2.msra.mxu0 0.0
        %1136 = vmatprep.subr.mxu0 0.0
        %1137 = vmatpush2.msra.mxu0 0.0
        %1138 = vmatprep.subr.mxu0 0.0
        %1139 = vmatpush2.msra.mxu0 0.0
        %1140 = vmatprep.subr.mxu0 0.0
        %1141 = vmatpush2.msra.mxu0 0.0
        %1142 = vmatprep.subr.mxu0 0.0
        %1143 = vmatpush2.msra.mxu0 0.0
        %1144 = vmatprep.subr.mxu0 0.0
        %1145 = vmatpush2.msra.mxu0 0.0
        %1146 = vmatprep.subr.mxu0 0.0
        %1147 = vmatpush2.msra.mxu0 0.0
        %1148 = vmatprep.subr.mxu0 0.0
        %1149 = vmatpush2.msra.mxu0 0.0
        %1150 = vmatprep.mubr.f32.mxu0 0.0
        %v1151 = vand.u32 %v853, 4294901760
        %v1152 = vsub.f32 %v853, %v1151
        %v1153 = vand.u32 %v1152, 4294901760
        %1154 = vmatmul.mubr.f32.gmra.mxu0 %v1153
        %v1155 = vpop.f32.mrf.mxu0
        %v1156 = vadd.f32 %v1082, %v1155
        %v1157 = vpop.f32.mrf.mxu0
        %1158 = vdwg.mxu0
        %1159 = vmatprep.subr.mxu0 0.0
        %1160 = vmatpush1.msra.mxu0 0.0
        %1161 = vmatprep.subr.mxu0 0.0
        %1162 = vmatpush1.msra.mxu0 0.0
        %1163 = vmatprep.subr.mxu0 0.0
        %1164 = vmatpush1.msra.mxu0 0.0
        %1165 = vmatprep.subr.mxu0 0.0
        %1166 = vmatpush1.msra.mxu0 0.0
        %1167 = vmatprep.subr.mxu0 0.0
        %1168 = vmatpush1.msra.mxu0 0.0
        %1169 = vmatprep.subr.mxu0 0.0
        %1170 = vmatpush1.msra.mxu0 0.0
        %1171 = vmatprep.subr.mxu0 0.0
        %1172 = vmatpush1.msra.mxu0 0.0
        %1173 = vmatprep.subr.mxu0 0.0
        %1174 = vmatpush1.msra.mxu0 0.0
        %1175 = vmatprep.subr.mxu0 0.0
        %1176 = vmatpush1.msra.mxu0 0.0
        %1177 = vmatprep.subr.mxu0 0.0
        %1178 = vmatpush1.msra.mxu0 0.0
        %1179 = vmatprep.subr.mxu0 0.0
        %1180 = vmatpush1.msra.mxu0 0.0
        %1181 = vmatprep.subr.mxu0 0.0
        %1182 = vmatpush1.msra.mxu0 0.0
        %1183 = vmatprep.subr.mxu0 0.0
        %1184 = vmatpush1.msra.mxu0 0.0
        %1185 = vmatprep.subr.mxu0 0.0
        %1186 = vmatpush1.msra.mxu0 0.0
        %1187 = vmatprep.subr.mxu0 0.0
        %1188 = vmatpush1.msra.mxu0 0.0
        %1189 = vmatprep.subr.mxu0 0.0
        %v1190 = vand.u32 %v857, 4294901760
        %v1191 = vsub.f32 %v857, %v1190
        %v1192 = vand.u32 %v1191, 4294901760
        %1193 = vmatpush1.msra.mxu0 %v1192
        %1194 = vmatprep.subr.mxu0 0.0
        %1195 = vmatpush2.msra.mxu0 0.0
        %1196 = vmatprep.subr.mxu0 0.0
        %1197 = vmatpush2.msra.mxu0 0.0
        %1198 = vmatprep.subr.mxu0 0.0
        %1199 = vmatpush2.msra.mxu0 0.0
        %1200 = vmatprep.subr.mxu0 0.0
        %1201 = vmatpush2.msra.mxu0 0.0
        %1202 = vmatprep.subr.mxu0 0.0
        %1203 = vmatpush2.msra.mxu0 0.0
        %1204 = vmatprep.subr.mxu0 0.0
        %1205 = vmatpush2.msra.mxu0 0.0
        %1206 = vmatprep.subr.mxu0 0.0
        %1207 = vmatpush2.msra.mxu0 0.0
        %1208 = vmatprep.subr.mxu0 0.0
        %1209 = vmatpush2.msra.mxu0 0.0
        %1210 = vmatprep.subr.mxu0 0.0
        %1211 = vmatpush2.msra.mxu0 0.0
        %1212 = vmatprep.subr.mxu0 0.0
        %1213 = vmatpush2.msra.mxu0 0.0
        %1214 = vmatprep.subr.mxu0 0.0
        %1215 = vmatpush2.msra.mxu0 0.0
        %1216 = vmatprep.subr.mxu0 0.0
        %1217 = vmatpush2.msra.mxu0 0.0
        %1218 = vmatprep.subr.mxu0 0.0
        %1219 = vmatpush2.msra.mxu0 0.0
        %1220 = vmatprep.subr.mxu0 0.0
        %1221 = vmatpush2.msra.mxu0 0.0
        %1222 = vmatprep.subr.mxu0 0.0
        %1223 = vmatpush2.msra.mxu0 0.0
        %1224 = vmatprep.subr.mxu0 0.0
        %1225 = vmatpush2.msra.mxu0 0.0
        %1226 = vmatprep.mubr.f32.mxu0 0.0
        %v1227 = vand.u32 %v853, 4294901760
        %1228 = vmatmul.mubr.f32.gmra.mxu0 %v1227
        %v1229 = vpop.f32.mrf.mxu0
        %v1230 = vadd.f32 %v1156, %v1229
        %v1231 = vpop.f32.mrf.mxu0
        %1232 = vdwg.mxu0
        %1233 = vmatprep.subr.mxu0 0.0
        %1234 = vmatpush1.msra.mxu0 0.0
        %1235 = vmatprep.subr.mxu0 0.0
        %1236 = vmatpush1.msra.mxu0 0.0
        %1237 = vmatprep.subr.mxu0 0.0
        %1238 = vmatpush1.msra.mxu0 0.0
        %1239 = vmatprep.subr.mxu0 0.0
        %1240 = vmatpush1.msra.mxu0 0.0
        %1241 = vmatprep.subr.mxu0 0.0
        %1242 = vmatpush1.msra.mxu0 0.0
        %1243 = vmatprep.subr.mxu0 0.0
        %1244 = vmatpush1.msra.mxu0 0.0
        %1245 = vmatprep.subr.mxu0 0.0
        %1246 = vmatpush1.msra.mxu0 0.0
        %1247 = vmatprep.subr.mxu0 0.0
        %1248 = vmatpush1.msra.mxu0 0.0
        %1249 = vmatprep.subr.mxu0 0.0
        %1250 = vmatpush1.msra.mxu0 0.0
        %1251 = vmatprep.subr.mxu0 0.0
        %1252 = vmatpush1.msra.mxu0 0.0
        %1253 = vmatprep.subr.mxu0 0.0
        %1254 = vmatpush1.msra.mxu0 0.0
        %1255 = vmatprep.subr.mxu0 0.0
        %1256 = vmatpush1.msra.mxu0 0.0
        %1257 = vmatprep.subr.mxu0 0.0
        %1258 = vmatpush1.msra.mxu0 0.0
        %1259 = vmatprep.subr.mxu0 0.0
        %1260 = vmatpush1.msra.mxu0 0.0
        %1261 = vmatprep.subr.mxu0 0.0
        %1262 = vmatpush1.msra.mxu0 0.0
        %1263 = vmatprep.subr.mxu0 0.0
        %v1264 = vand.u32 %v857, 4294901760
        %1265 = vmatpush1.msra.mxu0 %v1264
        %1266 = vmatprep.subr.mxu0 0.0
        %1267 = vmatpush2.msra.mxu0 0.0
        %1268 = vmatprep.subr.mxu0 0.0
        %1269 = vmatpush2.msra.mxu0 0.0
        %1270 = vmatprep.subr.mxu0 0.0
        %1271 = vmatpush2.msra.mxu0 0.0
        %1272 = vmatprep.subr.mxu0 0.0
        %1273 = vmatpush2.msra.mxu0 0.0
        %1274 = vmatprep.subr.mxu0 0.0
        %1275 = vmatpush2.msra.mxu0 0.0
        %1276 = vmatprep.subr.mxu0 0.0
        %1277 = vmatpush2.msra.mxu0 0.0
        %1278 = vmatprep.subr.mxu0 0.0
        %1279 = vmatpush2.msra.mxu0 0.0
        %1280 = vmatprep.subr.mxu0 0.0
        %1281 = vmatpush2.msra.mxu0 0.0
        %1282 = vmatprep.subr.mxu0 0.0
        %1283 = vmatpush2.msra.mxu0 0.0
        %1284 = vmatprep.subr.mxu0 0.0
        %1285 = vmatpush2.msra.mxu0 0.0
        %1286 = vmatprep.subr.mxu0 0.0
        %1287 = vmatpush2.msra.mxu0 0.0
        %1288 = vmatprep.subr.mxu0 0.0
        %1289 = vmatpush2.msra.mxu0 0.0
        %1290 = vmatprep.subr.mxu0 0.0
        %1291 = vmatpush2.msra.mxu0 0.0
        %1292 = vmatprep.subr.mxu0 0.0
        %1293 = vmatpush2.msra.mxu0 0.0
        %1294 = vmatprep.subr.mxu0 0.0
        %1295 = vmatpush2.msra.mxu0 0.0
        %1296 = vmatprep.subr.mxu0 0.0
        %1297 = vmatpush2.msra.mxu0 0.0
        %1298 = vmatprep.mubr.f32.mxu0 0.0
        %v1299 = vand.u32 %v853, 4294901760
        %1300 = vmatmul.mubr.f32.gmra.mxu0 %v1299
        %v1301 = vpop.f32.mrf.mxu0
        %v1302 = vadd.f32 %v1230, %v1301
        %v1303 = vpop.f32.mrf.mxu0
        %1304 = vdwg.mxu0
        %v1305 = vxor.u32 %v1302, 2147483648
        %v1306 = vmul.f32 %v1305, 1.442695
        %v1307 = vpow.pop %v1306
        %v1308 = vadd.f32 %v1307, 1.0
        %v1309 = vrcp.pop %v1308
        %v1310 = vmul.f32 1.0, %v1309
        %v1311 = vlaneseq
        %v1312 = vshrl.u32 %v1311, 7
        %v1313 = vsub.s32 0, %v1312
        %v1314 = vrot.slane %v1310, %v1313
        %1316 = vbcast.lane.b32.xlu0 %v1314, 256
        %v1317 = vpop.permute.xlu0 %1316
        %s1319 = sor.u32 256, 8
        %1320 = vbcast.lane.b32.xlu0 %v1314, %s1319
        %v1321 = vpop.permute.xlu0 %1320
        %s1323 = sor.u32 256, 16
        %1324 = vbcast.lane.b32.xlu0 %v1314, %s1323
        %v1325 = vpop.permute.xlu0 %1324
        %s1327 = sor.u32 256, 24
        %1328 = vbcast.lane.b32.xlu0 %v1314, %s1327
        %v1329 = vpop.permute.xlu0 %1328
        %s1331 = sor.u32 256, 32
        %1332 = vbcast.lane.b32.xlu0 %v1314, %s1331
        %v1333 = vpop.permute.xlu0 %1332
        %s1335 = sor.u32 256, 40
        %1336 = vbcast.lane.b32.xlu0 %v1314, %s1335
        %v1337 = vpop.permute.xlu0 %1336
        %s1339 = sor.u32 256, 48
        %1340 = vbcast.lane.b32.xlu0 %v1314, %s1339
        %v1341 = vpop.permute.xlu0 %1340
        %s1343 = sor.u32 256, 56
        %1344 = vbcast.lane.b32.xlu0 %v1314, %s1343
        %v1345 = vpop.permute.xlu0 %1344
        %v1346 = vmul.f32 %v189, %v1317
        %v1347 = vmul.f32 %v190, %v1317
        %v1348 = vmul.f32 %v191, %v1321
        %v1349 = vmul.f32 %v192, %v1321
        %v1350 = vmul.f32 %v193, %v1325
        %v1351 = vmul.f32 %v194, %v1325
        %v1352 = vmul.f32 %v195, %v1329
        %v1353 = vmul.f32 %v196, %v1329
        %v1354 = vmul.f32 %v197, %v1333
        %v1355 = vmul.f32 %v198, %v1333
        %v1356 = vmul.f32 %v199, %v1337
        %v1357 = vmul.f32 %v200, %v1337
        %v1358 = vmul.f32 %v201, %v1341
        %v1359 = vmul.f32 %v202, %v1341
        %v1360 = vmul.f32 %v203, %v1345
        %v1361 = vmul.f32 %v204, %v1345
        %1362 = vst [vmem:[%s188] sm:$0xff] %v1346
        %1363 = vst [vmem:[%s188 + $0x8] sm:$0xff] %v1347
        %1364 = vst [vmem:[%s188 + $0x10] sm:$0xff] %v1348
        %1365 = vst [vmem:[%s188 + $0x18] sm:$0xff] %v1349
        %1366 = vst [vmem:[%s188 + $0x20] sm:$0xff] %v1350
        %1367 = vst [vmem:[%s188 + $0x28] sm:$0xff] %v1351
        %1368 = vst [vmem:[%s188 + $0x30] sm:$0xff] %v1352
        %1369 = vst [vmem:[%s188 + $0x38] sm:$0xff] %v1353
        %1370 = vst [vmem:[%s188 + $0x40] sm:$0xff] %v1354
        %1371 = vst [vmem:[%s188 + $0x48] sm:$0xff] %v1355
        %1372 = vst [vmem:[%s188 + $0x50] sm:$0xff] %v1356
        %1373 = vst [vmem:[%s188 + $0x58] sm:$0xff] %v1357
        %1374 = vst [vmem:[%s188 + $0x60] sm:$0xff] %v1358
        %1375 = vst [vmem:[%s188 + $0x68] sm:$0xff] %v1359
        %1376 = vst [vmem:[%s188 + $0x70] sm:$0xff] %v1360
        %1377 = vst [vmem:[%s188 + $0x78] sm:$0xff] %v1361
        %s1378 = sand.u32 %s96, 1
        %s1379 = scalar_lea.sflag [#allocation4], %s1378
        %s1380 = sand.u32 %s96, 1
        %s1381 = smul.addr %s1380, 128
        %s1382 = scalar_lea.vmem [#allocation5], %s1381
        // Predicated region
        $region37: #{tpu_custom_call.1} parent=31 // pred_check
          %p1383 = pneg %p106
        $region38: #{tpu_custom_call.1} parent=31 // pred_check_branch
          %1385 = sbr.rel (%p1383) target = $region40
        $region39: #{tpu_custom_call.1} parent=31 // pred_region
          %s1387 = ssub.s32 2048, 2048
          %1388 = vsyncadd %s1379, %s1387
          %s1389 = smul.addr %s20, 16
          %s1390 = smul.addr %s1389, 128
          %s1391 = scalar_lea.hbm %s3, %s1390
          %s1392 = sshll.u32 %s1382, 4
          %s1393 = int_to_ptr.vmem [resolvable:$true] %s1392
          %1398 = dma.vmem_to_hbm [thread:$0]  %s1393, 2048, %s1391, %s1379, 256, 256, 16
        $region40: #{tpu_custom_call.1} parent=31 // pred_fallthru
          _
      $region32: #{tpu_custom_call.1} parent=5 // pred_fallthru
        _
      %p1399 = scmp.le.s32.totalorder 2, %s15
      // Predicated region
      $region41: #{tpu_custom_call.1} parent=5 // pred_check
        %p1400 = pneg %p1399
      $region42: #{tpu_custom_call.1} parent=5 // pred_check_branch
        %1402 = sbr.rel (%p1400) target = $region44
      $region43: #{tpu_custom_call.1} parent=5 // pred_region
        %s1403 = ssub.s32 %s15, 2
        // Predicated region
        $region45: #{tpu_custom_call.1} parent=43 // pred_check
          %p1404 = pneg %p112
        $region46: #{tpu_custom_call.1} parent=43 // pred_check_branch
          %1406 = sbr.rel (%p1404) target = $region48
        $region47: #{tpu_custom_call.1} parent=43 // pred_region
          %s1407 = sand.u32 %s97, 1
          %s1408 = scalar_lea.sflag [#allocation4], %s1407
          %s1409 = sand.u32 %s97, 1
          %s1410 = smul.addr %s1409, 128
          %s1411 = scalar_lea.vmem [#allocation5], %s1410
          %1412 = dma.done %s1408, 2048
        $region48: #{tpu_custom_call.1} parent=43 // pred_fallthru
          _
      $region44: #{tpu_custom_call.1} parent=5 // pred_fallthru
        _
    $region6: #{tpu_custom_call.1} parent=1 // loop_footer
      %s19 = sadd.s32 1, %s15
    $region7: #{tpu_custom_call.1} parent=1 // loop_footer_branch
      %14 = sbr.rel target = $region3
    $region8: #{tpu_custom_call.1} parent=1 // loop_exit
      _
    %1413 = vsyncpa [#allocation3], 1
    %s1414 = scalar_lea.sflag [#allocation3], 1
    %1415 = vsyncpa %s1414, 1
    %1416 = vsyncpa [#allocation4], 1
    %s1417 = scalar_lea.sflag [#allocation4], 1
    %1418 = vsyncpa %s1417, 1

</llo_original>
